<compile_context>
chip_gen: v7x
topology: tpu7x:2x2x1
jax: 0.10.0
libtpu: 0.0.40
codegen_flags: <defaults>
</compile_context>

<pallas_src>
import jax
import jax.numpy as jnp
from jax.experimental import pallas as pl
from jax.experimental.pallas import tpu as pltpu


def _conv1x1_kernel(x_ref, w_ref, b_ref, o_ref):
    # x_ref: (1, Cin, T) pixel tile (spatial dim T is lane-dense),
    # w_ref: (Cout, Cin), b_ref: (Cout, 1) f32, o_ref: (1, Cout, T).
    acc = jnp.dot(w_ref[...], x_ref[0], preferred_element_type=jnp.float32)
    o_ref[0] = (acc + b_ref[...]).astype(o_ref.dtype)


def _tpu_chip_info():
    """(tensorcores_per_chip, activation VMEM budget bytes) — heuristic only."""
    kind = ""
    try:
        kind = jax.devices()[0].device_kind.lower()
    except Exception:
        pass
    single_core = any(t in kind for t in
                      ("v5e", "v5 lite", "v5lite", "v6e", "v6 lite", "v6lite"))
    if single_core:
        # v5e / v6e: 1 TensorCore, 128 MiB physical VMEM -> roomier budget.
        return 1, 24 * 1024 * 1024
    # Default: assume a 2-TensorCore chip with the small (64 MiB) VMEM (v7x-safe).
    return 2, 12 * 1024 * 1024


def _pick_tile_hw(hw, n_batch, cin, cout, x_itemsize, w_itemsize,
                  *, num_cores, act_budget_bytes):
    """Smallest multiple of 128 dividing `hw` that
       (a) puts >= ~1 MiB of activations in flight per grid step (HBM-roofline
           plateau; bigger tiles only degrade pipelining), and
       (b) keeps >= 4 grid steps per TensorCore (DMA overlap + megacore balance),
       subject to the double-buffered VMEM budget (weights/bias included)."""
    candidates = [t for t in range(128, hw + 1, 128) if hw % t == 0]

    # double-buffered x-block + out-block per spatial element, plus the
    # (double-buffered) resident weight and bias blocks
    per_elem = 2 * (cin + cout) * x_itemsize
    fixed = 2 * (cout * cin + cout) * w_itemsize
    cap = max(128, (act_budget_bytes - fixed) // per_elem)
    fitting = [t for t in candidates if t <= cap]
    candidates = fitting if fitting else [candidates[0]]

    target_block_bytes = 1 << 20              # ~1 MiB: >=85% of HBM roofline
    min_steps = 4 * max(1, num_cores)         # >= 4 steps per TensorCore

    ok_steps = [t for t in candidates if n_batch * (hw // t) >= min_steps]
    if not ok_steps:
        return candidates[0]                  # tiny problem: maximize step count
    for t in ok_steps:                        # ascending -> smallest past plateau
        if (cin + cout) * t * x_itemsize >= target_block_bytes:
            return t
    return ok_steps[-1]                       # largest tile that still keeps steps


def conv1x1_pallas(x_flat, w_mat, b_col):
    """x_flat: (N, Cin, HW), w_mat: (Cout, Cin) in x dtype, b_col: (Cout, 1) f32
       -> (N, Cout, HW) in x dtype."""
    N, Cin, HW = x_flat.shape
    Cout = w_mat.shape[0]
    x_itemsize = jnp.dtype(x_flat.dtype).itemsize
    w_itemsize = jnp.dtype(w_mat.dtype).itemsize

    # Small-channel escape hatch: below the sublane minimum the (Cin,T)/(Cout,T)
    # blocks are heavily sublane-padded and the MXU runs nearly empty -- let XLA
    # handle those shallow layers instead of regressing vs. plain fusion.
    min_sublane = 8 if x_itemsize >= 4 else 16
    if Cin < min_sublane or Cout < min_sublane:
        y = jnp.einsum("oc,nct->not", w_mat.astype(jnp.float32),
                       x_flat.astype(jnp.float32)) + b_col
        return y.astype(x_flat.dtype)

    # UNet spatial sizes are multiples of 128; only odd shapes pay a pad copy.
    hw_pad = HW
    if HW % 128 != 0:
        hw_pad = ((HW + 127) // 128) * 128
        x_flat = jnp.pad(x_flat, ((0, 0), (0, 0), (0, hw_pad - HW)))

    num_cores, act_budget = _tpu_chip_info()
    tile = _pick_tile_hw(hw_pad, N, Cin, Cout, x_itemsize, w_itemsize,
                         num_cores=num_cores, act_budget_bytes=act_budget)

    # Scoped-VMEM limit: what this launch actually needs (double-buffered x/out
    # blocks + double-buffered weights/bias) plus headroom, generation-safe cap.
    needed = (2 * (Cin + Cout) * tile * x_itemsize
              + 2 * (Cout * Cin + Cout) * w_itemsize)
    vmem_limit = int(min(max(needed + (4 << 20), 16 << 20), 48 << 20))

    out = pl.pallas_call(
        _conv1x1_kernel,
        out_shape=jax.ShapeDtypeStruct((N, Cout, hw_pad), x_flat.dtype),
        grid_spec=pltpu.PrefetchScalarGridSpec(
            num_scalar_prefetch=0,
            grid=(N, hw_pad // tile),
            in_specs=[
                pl.BlockSpec((1, Cin, tile), lambda n, t: (n, 0, t)),   # pixel tile
                pl.BlockSpec((Cout, Cin), lambda n, t: (0, 0)),         # resident weights
                pl.BlockSpec((Cout, 1), lambda n, t: (0, 0)),           # bias column
            ],
            out_specs=pl.BlockSpec((1, Cout, tile), lambda n, t: (n, 0, t)),
        ),
        compiler_params=pltpu.CompilerParams(
            dimension_semantics=("parallel", "parallel"),
            vmem_limit_bytes=vmem_limit,
        ),
    )(x_flat, w_mat, b_col)

    if hw_pad != HW:
        out = out[:, :, :HW]
    return out


def up_interpolate_sample(x, featuremap, weight, bias):
    """Forward pass of UpInterplateSample.

    x:          (N, Cin, H, W)      NCHW
    featuremap: (N, Cf, 2H, 2W)     NCHW
    weight:     (Cout, Cin, 1, 1)   PyTorch Conv2d layout, Cout = Cin // 2
    bias:       (Cout,)
    returns:    (N, Cout + Cf, 2H, 2W)

    Math note: F.interpolate(mode='nearest', x2) followed by a 1x1 conv equals the
    1x1 conv followed by the same nearest upsample, so the conv runs on the small
    (pre-upsample) tensor.
    """
    N, Cin, H, W = x.shape
    Cout = weight.shape[0]

    x_flat = x.reshape(N, Cin, H * W)                  # native NCHW view, no transpose
    w_mat = weight.reshape(Cout, Cin).astype(x.dtype)  # match activation dtype (no mixed dot)
    b_col = bias.reshape(Cout, 1).astype(jnp.float32)  # added to the f32 accumulator

    y = conv1x1_pallas(x_flat, w_mat, b_col)           # (N, Cout, H*W)
    y = y.reshape(N, Cout, H, W)

    # Nearest x2 upsample + channel concat stay as XLA index plumbing: the broadcast
    # and reshape are layout metadata that fuse into the concatenate's output fusion
    # (y read once, featuremap read once, output written once).
    # TODO(synk): the concat copy itself dominates this module's HBM traffic; removing
    # it requires the downstream 3x3 ConvBlock (cross-module, not implemented here) to
    # consume y_up and featuremap as separate operands with channel-split weights.
    y_up = jnp.broadcast_to(y[:, :, :, None, :, None], (N, Cout, H, 2, W, 2))
    y_up = y_up.reshape(N, Cout, 2 * H, 2 * W)
    return jnp.concatenate([y_up, featuremap], axis=1)


if __name__ == "__main__":
    key = jax.random.PRNGKey(0)
    k_x, k_f, k_w, k_b = jax.random.split(key, 4)

    # Small shapes consistent with UpInterplateSample(in_channels=16); channels are
    # kept at/above the f32 sublane minimum so the Pallas matmul path is exercised.
    N, Cin, H, W = 2, 16, 16, 16
    Cout = Cin // 2
    Cf = Cout  # UNet skip connection carries Cin // 2 channels

    x = jax.random.normal(k_x, (N, Cin, H, W), dtype=jnp.float32)
    featuremap = jax.random.normal(k_f, (N, Cf, 2 * H, 2 * W), dtype=jnp.float32)

    # Deterministic synthetic parameters (Conv2d(in, in//2, 1, 1) init ranges)
    fan_in = Cin * 1 * 1
    bound = 1.0 / (fan_in ** 0.5)
    weight = jax.random.uniform(k_w, (Cout, Cin, 1, 1), jnp.float32, -bound, bound)
    bias = jax.random.uniform(k_b, (Cout,), jnp.float32, -bound, bound)

    out = jax.jit(up_interpolate_sample)(x, featuremap, weight, bias)
    out = jax.block_until_ready(out)

    # Plain-JAX reference in the ORIGINAL op order: upsample -> 1x1 conv -> concat.
    x_up = jnp.repeat(jnp.repeat(x, 2, axis=2), 2, axis=3)
    ref_conv = jnp.einsum("nchw,oc->nohw", x_up, weight.reshape(Cout, Cin)) \
        + bias.reshape(1, Cout, 1, 1)
    ref = jnp.concatenate([ref_conv, featuremap], axis=1)

    assert out.shape == ref.shape == (N, Cout + Cf, 2 * H, 2 * W), (out.shape, ref.shape)
    max_err = float(jnp.max(jnp.abs(out - ref)))
    assert jnp.allclose(out, ref, atol=1e-5, rtol=1e-5), max_err

    print("KERNEL_OK")
</pallas_src>

<mosaic_0001>
module attributes {stable_mosaic.version = 11 : i64} {
  func.func @_conv1x1_kernel(%arg0: i32, %arg1: i32, %arg2: memref<1x16x128xf32, #tpu.memory_space<vmem>>, %arg3: memref<8x16xf32, #tpu.memory_space<vmem>>, %arg4: memref<8x1xf32, #tpu.memory_space<vmem>>, %arg5: memref<1x8x128xf32, #tpu.memory_space<vmem>>) attributes {dimension_semantics = [#tpu.dimension_semantics<parallel>, #tpu.dimension_semantics<parallel>], iteration_bounds = array<i64: 2, 2>, scalar_prefetch = 0 : i64, scratch_operands = 0 : i64, tpu.core_type = #tpu.core_type<tc>, window_params = [{transform_indices = @transform_0, window_bounds = array<i64: 1, 16, 128>}, {pipeline_mode = #tpu.pipeline_mode<synchronous>, transform_indices = @transform_1, window_bounds = array<i64: 8, 16>}, {pipeline_mode = #tpu.pipeline_mode<synchronous>, transform_indices = @transform_2, window_bounds = array<i64: 8, 1>}, {transform_indices = @transform_3, window_bounds = array<i64: 1, 8, 128>}]} {
    %c0 = arith.constant 0 : index
    %c0_0 = arith.constant 0 : index
    %0 = vector.load %arg3[%c0, %c0_0] : memref<8x16xf32, #tpu.memory_space<vmem>>, vector<8x16xf32>
    %c0_1 = arith.constant 0 : index
    %c0_2 = arith.constant 0 : index
    %c0_3 = arith.constant 0 : index
    %1 = vector.load %arg2[%c0_1, %c0_2, %c0_3] : memref<1x16x128xf32, #tpu.memory_space<vmem>>, vector<1x16x128xf32>
    %2 = vector.shape_cast %1 : vector<1x16x128xf32> to vector<16x128xf32>
    %cst = arith.constant dense<0.000000e+00> : vector<8x128xf32>
    %3 = tpu.matmul %0, %2, %cst {dimension_numbers = #tpu.dot_dimension_numbers<[1], [0], [0], [1], [0, 0, 1, 1], [], []>} : vector<8x16xf32>, vector<16x128xf32>, vector<8x128xf32> -> vector<8x128xf32>
    %c0_4 = arith.constant 0 : index
    %c0_5 = arith.constant 0 : index
    %4 = vector.load %arg4[%c0_4, %c0_5] : memref<8x1xf32, #tpu.memory_space<vmem>>, vector<8x1xf32>
    %5 = vector.broadcast %4 : vector<8x1xf32> to vector<8x128xf32>
    %6 = arith.addf %3, %5 : vector<8x128xf32>
    %c0_6 = arith.constant 0 : index
    %c0_7 = arith.constant 0 : index
    %c0_8 = arith.constant 0 : index
    %7 = vector.load %arg5[%c0_6, %c0_7, %c0_8] : memref<1x8x128xf32, #tpu.memory_space<vmem>>, vector<1x8x128xf32>
    %8 = vector.shape_cast %7 : vector<1x8x128xf32> to vector<8x128xf32>
    %9 = vector.shape_cast %6 : vector<8x128xf32> to vector<1x8x128xf32>
    tpu.vector_store %arg5[%c0_6, %c0_7, %c0_8], %9 {strides = array<i32>} : memref<1x8x128xf32, #tpu.memory_space<vmem>>, vector<1x8x128xf32>,
    return
  }
  func.func @transform_0(%arg0: i32, %arg1: i32) -> (i32, i32, i32) {
    %c0_i32 = arith.constant 0 : i32
    %c0_i32_0 = arith.constant 0 : i32
    return %arg0, %c0_i32, %arg1 : i32, i32, i32
  }
  func.func @transform_1(%arg0: i32, %arg1: i32) -> (i32, i32) {
    %c0_i32 = arith.constant 0 : i32
    %c0_i32_0 = arith.constant 0 : i32
    %c0_i32_1 = arith.constant 0 : i32
    return %c0_i32, %c0_i32_0 : i32, i32
  }
  func.func @transform_2(%arg0: i32, %arg1: i32) -> (i32, i32) {
    %c0_i32 = arith.constant 0 : i32
    %c0_i32_0 = arith.constant 0 : i32
    %c0_i32_1 = arith.constant 0 : i32
    return %c0_i32, %c0_i32_0 : i32, i32
  }
  func.func @transform_3(%arg0: i32, %arg1: i32) -> (i32, i32, i32) {
    %c0_i32 = arith.constant 0 : i32
    %c0_i32_0 = arith.constant 0 : i32
    return %arg0, %c0_i32, %arg1 : i32, i32, i32
  }
}

</mosaic_0001>

<llo_original>
// kernel: up_interpolate_sample.1
$region0: #{up_interpolate_sample.1}
  #allocation0 [shape = 'u32[]', space=smem, size = 0x4, offset = 0x4, fixed_abs, tag = 'smem constant byte address 0x4 - core index']
  #allocation1 [shape = 'u32[144,128]{1,0:T(1,128)}', space=vmem, size = 0x12000, scoped, tag = 'internal scratch']
  %s0 = inlined_call_operand.vmem [shape: f32[2,16,256], index: 0, kind: input, shape index: {}]
  %s1 = inlined_call_operand.vmem [shape: f32[8,16], index: 1, kind: input, shape index: {}]
  %s2 = inlined_call_operand.vmem [shape: f32[8,1], index: 2, kind: input, shape index: {}]
  %s3 = inlined_call_operand.vmem [shape: f32[2,8,256], index: 3, kind: output, shape index: {}]
  %s4 = sld [smem:[#allocation0]]
  $region83: #{up_interpolate_sample.1} parent=0
    _
  %s6 = ssub.s32 1, %s4
  %s7 = scalar_select 0, %s6, %s4
  $region1: #{up_interpolate_sample.1} parent=0
    #allocation2 [shape = 'u8[16384]{0}', space=vmem, size = 0x4000, scoped, tag = 'input window, operand 0']
    loop: start=0, step=1, limit=6
    $region2: #{up_interpolate_sample.1} parent=1 // loop_pre_header
      _
    $region3: #{up_interpolate_sample.1} parent=1 // loop_header
      %s9 = sphi 0, %s13
      %p10 = scmp.ge.s32.totalorder %s9, 6
      %s16 = sphi 0, %s28
      %s17 = sphi 0, %s24
      %s18 = sphi 0, %s16
      %s19 = sphi 0, %s17
      %s20 = sphi 0, %s18
      %s21 = sphi 0, %s19
      %s33 = sphi 0, %s35
      %s36 = sphi 0, %s33
      %s37 = sphi 0, %s36
      %s53 = sphi 0, %s37
      %s57 = sphi 0, %s57
      %s59 = sphi 0, %s57
      %s60 = sphi 0, %s59
      %s74 = sphi 0, %s60
      %s78 = sphi 0, %s78
      %s80 = sphi 0, %s78
      %s81 = sphi 0, %s80
      %s95 = sphi 0, %s81
      %s103 = sphi 0, %s105
      %s106 = sphi 0, %s103
      %s107 = sphi 0, %s106
      %s123 = sphi 0, %s107
    $region4: #{up_interpolate_sample.1} parent=1 // loop_header_branch
      %12 = sbr.rel (%p10) target = $region8
    $region5: #{up_interpolate_sample.1} parent=1 // loop_body
      %s14 = ssub.s32 %s9, 1
      %s15 = ssub.s32 %s9, 2
      %s22 = sadd.s32 1, %s17
      %p23 = scmp.ge.s32.totalorder %s22, 2
      %s24 = scalar_select %p23, 0, %s22
      %s25 = sadd.s32 1, %s16
      %s26 = scalar_select %p23, %s25, %s16
      %p27 = scmp.ge.s32.totalorder %s26, 2
      %s28 = scalar_select %p27, 0, %s26
      %s29 = ssub.s32 %s16, %s28
      %s30 = ssub.s32 %s17, %s24
      %s31 = sor.u32 %s29, %s30
      %p32 = scmp.eq.s32.totalorder %s31, 0
      %s34 = sadd.s32 %s33, 1
      %s35 = scalar_select %p32, %s33, %s34
      %p38 = pneg %p32
      %p39 = scmp.eq.s32.totalorder %s9, 3
      %p40 = por %p38, %p39
      %p41 = scmp.ne.s32.totalorder %s33, %s36
      %p42 = scmp.eq.s32.totalorder %s9, 0
      %p43 = por %p41, %p42
      %p44 = scmp.ne.s32.totalorder %s33, %s36
      %p45 = scmp.eq.s32.totalorder %s14, 3
      %p46 = por %p44, %p45
      %p47 = scmp.ne.s32.totalorder %s36, %s37
      %p48 = scmp.eq.s32.totalorder %s14, 0
      %p49 = por %p47, %p48
      %p50 = scmp.ne.s32.totalorder %s36, %s37
      %p51 = scmp.eq.s32.totalorder %s15, 3
      %p52 = por %p50, %p51
      %p54 = scmp.ne.s32.totalorder %s37, %s53
      %p55 = scmp.eq.s32.totalorder %s15, 0
      %p56 = por %p54, %p55
      %s58 = sadd.s32 %s57, 1
      %p61 = scmp.eq.s32.totalorder %s9, 3
      %p62 = scmp.ne.s32.totalorder %s57, %s59
      %p63 = scmp.eq.s32.totalorder %s9, 0
      %p64 = por %p62, %p63
      %p65 = scmp.ne.s32.totalorder %s57, %s59
      %p66 = scmp.eq.s32.totalorder %s14, 3
      %p67 = por %p65, %p66
      %p68 = scmp.ne.s32.totalorder %s59, %s60
      %p69 = scmp.eq.s32.totalorder %s14, 0
      %p70 = por %p68, %p69
      %p71 = scmp.ne.s32.totalorder %s59, %s60
      %p72 = scmp.eq.s32.totalorder %s15, 3
      %p73 = por %p71, %p72
      %p75 = scmp.ne.s32.totalorder %s60, %s74
      %p76 = scmp.eq.s32.totalorder %s15, 0
      %p77 = por %p75, %p76
      %s79 = sadd.s32 %s78, 1
      %p82 = scmp.eq.s32.totalorder %s9, 3
      %p83 = scmp.ne.s32.totalorder %s78, %s80
      %p84 = scmp.eq.s32.totalorder %s9, 0
      %p85 = por %p83, %p84
      %p86 = scmp.ne.s32.totalorder %s78, %s80
      %p87 = scmp.eq.s32.totalorder %s14, 3
      %p88 = por %p86, %p87
      %p89 = scmp.ne.s32.totalorder %s80, %s81
      %p90 = scmp.eq.s32.totalorder %s14, 0
      %p91 = por %p89, %p90
      %p92 = scmp.ne.s32.totalorder %s80, %s81
      %p93 = scmp.eq.s32.totalorder %s15, 3
      %p94 = por %p92, %p93
      %p96 = scmp.ne.s32.totalorder %s81, %s95
      %p97 = scmp.eq.s32.totalorder %s15, 0
      %p98 = por %p96, %p97
      %s99 = ssub.s32 %s16, %s28
      %s100 = ssub.s32 %s17, %s24
      %s101 = sor.u32 %s99, %s100
      %p102 = scmp.eq.s32.totalorder %s101, 0
      %s104 = sadd.s32 %s103, 1
      %s105 = scalar_select %p102, %s103, %s104
      %p108 = pneg %p102
      %p109 = scmp.eq.s32.totalorder %s9, 3
      %p110 = por %p108, %p109
      %p111 = scmp.ne.s32.totalorder %s103, %s106
      %p112 = scmp.eq.s32.totalorder %s9, 0
      %p113 = por %p111, %p112
      %p114 = scmp.ne.s32.totalorder %s103, %s106
      %p115 = scmp.eq.s32.totalorder %s14, 3
      %p116 = por %p114, %p115
      %p117 = scmp.ne.s32.totalorder %s106, %s107
      %p118 = scmp.eq.s32.totalorder %s14, 0
      %p119 = por %p117, %p118
      %p120 = scmp.ne.s32.totalorder %s106, %s107
      %p121 = scmp.eq.s32.totalorder %s15, 3
      %p122 = por %p120, %p121
      %p124 = scmp.ne.s32.totalorder %s107, %s123
      %p125 = scmp.eq.s32.totalorder %s15, 0
      %p126 = por %p124, %p125
      %p127 = scmp.le.s32.totalorder 1, %s9
      %p128 = scmp.lt.s32.totalorder %s9, 5
      %p129 = pnand %p127, %p128
      %p130 = pneg %p129
      // Predicated region
      $region9: #{up_interpolate_sample.1} parent=5 // pred_check
        _
      $region10: #{up_interpolate_sample.1} parent=5 // pred_check_branch
        %132 = sbr.rel (%p129) target = $region12
      $region11: #{up_interpolate_sample.1} parent=5 // pred_region
        %s133 = ssub.s32 %s9, 1
        // Predicated region
        $region13: #{up_interpolate_sample.1} parent=11 // pred_check
          %p134 = pneg %p70
        $region14: #{up_interpolate_sample.1} parent=11 // pred_check_branch
          %136 = sbr.rel (%p134) target = $region16
        $region15: #{up_interpolate_sample.1} parent=11 // pred_region
          _
        $region16: #{up_interpolate_sample.1} parent=11 // pred_fallthru
          _
        // Predicated region
        $region17: #{up_interpolate_sample.1} parent=11 // pred_check
          %p137 = pneg %p91
        $region18: #{up_interpolate_sample.1} parent=11 // pred_check_branch
          %139 = sbr.rel (%p137) target = $region20
        $region19: #{up_interpolate_sample.1} parent=11 // pred_region
          _
        $region20: #{up_interpolate_sample.1} parent=11 // pred_fallthru
          _
      $region12: #{up_interpolate_sample.1} parent=5 // pred_fallthru
        _
      %p140 = scmp.lt.s32.totalorder %s9, 4
      // Predicated region
      $region21: #{up_interpolate_sample.1} parent=5 // pred_check
        %p141 = pneg %p140
      $region22: #{up_interpolate_sample.1} parent=5 // pred_check_branch
        %143 = sbr.rel (%p141) target = $region24
      $region23: #{up_interpolate_sample.1} parent=5 // pred_region
        // Predicated region
        $region25: #{up_interpolate_sample.1} parent=23 // pred_check
          %p144 = pneg %p43
        $region26: #{up_interpolate_sample.1} parent=23 // pred_check_branch
          %146 = sbr.rel (%p144) target = $region28
        $region27: #{up_interpolate_sample.1} parent=23 // pred_region
          %s147 = sand.u32 %s33, 1
          %s148 = sand.u32 %s33, 1
          %s149 = smul.addr %s148, 16
          %s150 = scalar_lea.vmem [#allocation2], %s149
          %s151 = smul.addr %s16, 4
          %s152 = sadd.s32 %s17, %s151
          %s153 = smul.addr %s152, 8
          %s154 = scalar_lea.vmem %s0, %s153
          // Predicated region
          $region29: #{up_interpolate_sample.1} parent=27 // pred_check
            _
          $region30: #{up_interpolate_sample.1} parent=27 // pred_check_branch
            %156 = sbr.rel (0) target = $region32
          $region31: #{up_interpolate_sample.1} parent=27 // pred_region
            // Predicated region
            $region33: #{up_interpolate_sample.1} parent=31 // pred_check
              _
            $region34: #{up_interpolate_sample.1} parent=31 // pred_check_branch
              %158 = sbr.rel (0) target = $region36
            $region35: #{up_interpolate_sample.1} parent=31 // pred_region
              // Predicated region
              $region48: #{up_interpolate_sample.1} parent=35 // pred_check
                _
              $region49: #{up_interpolate_sample.1} parent=35 // pred_check_branch
                %175 = sbr.rel (0) target = $region51
              $region50: #{up_interpolate_sample.1} parent=35 // pred_region
                loop: start=0, step=1, limit=1
                $region52: #{up_interpolate_sample.1} parent=50 // loop_pre_header
                  _
                $region53: #{up_interpolate_sample.1} parent=50 // loop_header
                  %s177 = sphi 0, %s181
                  %p178 = scmp.ge.s32.totalorder %s177, 1
                  %s182 = sphi %s154, %s154
                  %s183 = sphi %s150, %s150
                $region54: #{up_interpolate_sample.1} parent=50 // loop_header_branch
                  %180 = sbr.rel (%p178) target = $region58
                $region55: #{up_interpolate_sample.1} parent=50 // loop_body
                  %v184 = vld [vmem:[%s182] sm:$0xff]
                  %185 = vst [vmem:[%s183] sm:$0xff] %v184
                  %v186 = vld [vmem:[%s182 + $0x10] sm:$0xff]
                  %187 = vst [vmem:[%s183 + $0x8] sm:$0xff] %v186
                $region56: #{up_interpolate_sample.1} parent=50 // loop_footer
                  %s181 = sadd.s32 1, %s177
                $region57: #{up_interpolate_sample.1} parent=50 // loop_footer_branch
                  %176 = sbr.rel target = $region53
                $region58: #{up_interpolate_sample.1} parent=50 // loop_exit
                  _
              $region51: #{up_interpolate_sample.1} parent=35 // pred_fallthru
                _
              // Predicated region
              $region59: #{up_interpolate_sample.1} parent=35 // pred_check
                _
              $region60: #{up_interpolate_sample.1} parent=35 // pred_check_branch
                %189 = sbr.rel target = $region62
              $region61: #{up_interpolate_sample.1} parent=35 // pred_region
                _
              $region62: #{up_interpolate_sample.1} parent=35 // pred_fallthru
                _
            $region36: #{up_interpolate_sample.1} parent=31 // pred_fallthru
              _
            // Predicated region
            $region37: #{up_interpolate_sample.1} parent=31 // pred_check
              _
            $region38: #{up_interpolate_sample.1} parent=31 // pred_check_branch
              %160 = sbr.rel target = $region40
            $region39: #{up_interpolate_sample.1} parent=31 // pred_region
              loop: start=0, step=1, limit=1
              $region41: #{up_interpolate_sample.1} parent=39 // loop_pre_header
                _
              $region42: #{up_interpolate_sample.1} parent=39 // loop_header
                %s163 = sphi 0, %s167
                %p164 = scmp.ge.s32.totalorder %s163, 1
                %s168 = sphi %s154, %s154
                %s169 = sphi %s150, %s150
              $region43: #{up_interpolate_sample.1} parent=39 // loop_header_branch
                %166 = sbr.rel (%p164) target = $region47
              $region44: #{up_interpolate_sample.1} parent=39 // loop_body
                %v170 = vld [vmem:[%s168] sm:$0xff]
                %171 = vst [vmem:[%s169] sm:$0xff] %v170
                %v172 = vld [vmem:[%s168 + $0x10] sm:$0xff]
                %173 = vst [vmem:[%s169 + $0x8] sm:$0xff] %v172
              $region45: #{up_interpolate_sample.1} parent=39 // loop_footer
                %s167 = sadd.s32 1, %s163
              $region46: #{up_interpolate_sample.1} parent=39 // loop_footer_branch
                %162 = sbr.rel target = $region42
              $region47: #{up_interpolate_sample.1} parent=39 // loop_exit
                _
            $region40: #{up_interpolate_sample.1} parent=31 // pred_fallthru
              _
          $region32: #{up_interpolate_sample.1} parent=27 // pred_fallthru
            _
          %190 = vnop
        $region28: #{up_interpolate_sample.1} parent=23 // pred_fallthru
          _
      $region24: #{up_interpolate_sample.1} parent=5 // pred_fallthru
        _
      %p191 = scmp.le.s32.totalorder 1, %s9
      %p192 = scmp.lt.s32.totalorder %s9, 5
      %p193 = pnand %p191, %p192
      %p194 = pneg %p193
      // Predicated region
      $region63: #{up_interpolate_sample.1} parent=5 // pred_check
        _
      $region64: #{up_interpolate_sample.1} parent=5 // pred_check_branch
        %196 = sbr.rel (%p193) target = $region66
      $region65: #{up_interpolate_sample.1} parent=5 // pred_region
        %s197 = ssub.s32 %s9, 1
        %s198 = sand.u32 %s36, 1
        %s199 = sand.u32 %s36, 1
        %s200 = smul.addr %s199, 16
        %s201 = scalar_lea.vmem [#allocation2], %s200
        // Predicated region
        $region67: #{up_interpolate_sample.1} parent=65 // pred_check
          %p202 = pneg %p49
        $region68: #{up_interpolate_sample.1} parent=65 // pred_check_branch
          %204 = sbr.rel (%p202) target = $region70
        $region69: #{up_interpolate_sample.1} parent=65 // pred_region
          _
        $region70: #{up_interpolate_sample.1} parent=65 // pred_fallthru
          _
        %s205 = sand.u32 %s36, 1
        %s206 = sand.u32 %s36, 1
        %s207 = smul.addr %s206, 16
        %s208 = scalar_lea.vmem [#allocation2], %s207
        %p209 = pneg %p49
        %p210 = pneg %p46
        %p211 = pneg %p70
        %p212 = pneg %p67
        %p213 = pneg %p91
        %p214 = pneg %p88
        %p215 = pneg %p119
        %p216 = pneg %p116
        %p217 = scmp.lt.s32.totalorder %s18, 1
        %s218 = scalar_select %p217, %s18, 1
        %p219 = scmp.lt.s32.totalorder %s19, 1
        %s220 = scalar_select %p219, %s19, 1
        %s221 = smul.addr %s218, 2
        %s222 = sadd.s32 %s220, %s221
        %s223 = smul.addr %s222, 8
        %s224 = scalar_lea.vmem %s3, %s223
        %p225 = scmp.lt.s32.totalorder %s18, 1
        %s226 = scalar_select %p225, %s18, 1
        %p227 = scmp.lt.s32.totalorder %s19, 1
        %s228 = scalar_select %p227, %s19, 1
        %s229 = smul.addr %s226, 2
        %s230 = sadd.s32 %s228, %s229
        %s231 = smul.addr %s230, 8
        %s232 = scalar_lea.vmem %s3, %s231
        %v233 = vld [vmem:[%s1] sm:$0xff]
        %v234 = vld [vmem:[%s201] sm:$0xff]
        %v235 = vld [vmem:[%s201 + $0x8] sm:$0xff]
        %v236 = vld [vmem:[%s2] sm:$0xff]
        %238 = vset.pattern.permute.xlu0 0
        %239 = vperm.xlu0 %238, %v236
        %v240 = vpop.permute.xlu0 %239
        %vm242 = vcmask 130048
        %v244 = vsel %vm242, %v233, 0
        %246 = vmatprep.subr.mxu0 0.0
        %247 = vmatpush1.msra.mxu0 %v234
        %248 = vmatprep.subr.mxu0 0.0
        %249 = vmatpush1.msra.mxu0 %v235
        %250 = vmatprep.subr.mxu0 0.0
        %251 = vmatpush1.msra.mxu0 0.0
        %252 = vmatprep.subr.mxu0 0.0
        %253 = vmatpush1.msra.mxu0 0.0
        %254 = vmatprep.subr.mxu0 0.0
        %255 = vmatpush1.msra.mxu0 0.0
        %256 = vmatprep.subr.mxu0 0.0
        %257 = vmatpush1.msra.mxu0 0.0
        %258 = vmatprep.subr.mxu0 0.0
        %259 = vmatpush1.msra.mxu0 0.0
        %260 = vmatprep.subr.mxu0 0.0
        %261 = vmatpush1.msra.mxu0 0.0
        %262 = vmatprep.subr.mxu0 0.0
        %263 = vmatpush1.msra.mxu0 0.0
        %264 = vmatprep.subr.mxu0 0.0
        %265 = vmatpush1.msra.mxu0 0.0
        %266 = vmatprep.subr.mxu0 0.0
        %267 = vmatpush1.msra.mxu0 0.0
        %268 = vmatprep.subr.mxu0 0.0
        %269 = vmatpush1.msra.mxu0 0.0
        %270 = vmatprep.subr.mxu0 0.0
        %271 = vmatpush1.msra.mxu0 0.0
        %272 = vmatprep.subr.mxu0 0.0
        %273 = vmatpush1.msra.mxu0 0.0
        %274 = vmatprep.subr.mxu0 0.0
        %275 = vmatpush1.msra.mxu0 0.0
        %276 = vmatprep.subr.mxu0 0.0
        %277 = vmatpush1.msra.mxu0 0.0
        %278 = vmatprep.subr.mxu0 0.0
        %279 = vmatpush1.msra.mxu0 0.0
        %280 = vmatprep.subr.mxu0 0.0
        %281 = vmatpush1.msra.mxu0 0.0
        %282 = vmatprep.subr.mxu0 0.0
        %283 = vmatpush1.msra.mxu0 0.0
        %284 = vmatprep.subr.mxu0 0.0
        %285 = vmatpush1.msra.mxu0 0.0
        %286 = vmatprep.subr.mxu0 0.0
        %287 = vmatpush1.msra.mxu0 0.0
        %288 = vmatprep.subr.mxu0 0.0
        %289 = vmatpush1.msra.mxu0 0.0
        %290 = vmatprep.subr.mxu0 0.0
        %291 = vmatpush1.msra.mxu0 0.0
        %292 = vmatprep.subr.mxu0 0.0
        %293 = vmatpush1.msra.mxu0 0.0
        %294 = vmatprep.subr.mxu0 0.0
        %295 = vmatpush1.msra.mxu0 0.0
        %296 = vmatprep.subr.mxu0 0.0
        %297 = vmatpush1.msra.mxu0 0.0
        %298 = vmatprep.subr.mxu0 0.0
        %299 = vmatpush1.msra.mxu0 0.0
        %300 = vmatprep.subr.mxu0 0.0
        %301 = vmatpush1.msra.mxu0 0.0
        %302 = vmatprep.subr.mxu0 0.0
        %303 = vmatpush1.msra.mxu0 0.0
        %304 = vmatprep.subr.mxu0 0.0
        %305 = vmatpush1.msra.mxu0 0.0
        %306 = vmatprep.subr.mxu0 0.0
        %307 = vmatpush1.msra.mxu0 0.0
        %308 = vmatprep.subr.mxu0 0.0
        %309 = vmatpush1.msra.mxu0 0.0
        %310 = vmatprep.mubr.f32.mxu0 0.0
        %311 = vmatmul.mubr.f32.gmra.mrb[0].mxu0 %v244
        %v312 = vpop.f32.mrb[0].mxu0
        %v313 = vadd.f32 %v240, %v312
        %v314 = vpop.f32.mrb[0].mxu0
        %315 = vdwg.mxu0
        %316 = vst [vmem:[%s232] sm:$0xff] %v313
        %p317 = scmp.lt.s32.totalorder %s18, 1
        %s318 = scalar_select %p317, %s18, 1
        %p319 = scmp.lt.s32.totalorder %s19, 1
        %s320 = scalar_select %p319, %s19, 1
        %s321 = smul.addr %s318, 2
        %s322 = sadd.s32 %s320, %s321
        %s323 = smul.addr %s322, 8
        %s324 = scalar_lea.vmem %s3, %s323
        // Predicated region
        $region71: #{up_interpolate_sample.1} parent=65 // pred_check
          %p325 = pneg %p116
        $region72: #{up_interpolate_sample.1} parent=65 // pred_check_branch
          %327 = sbr.rel (%p325) target = $region74
        $region73: #{up_interpolate_sample.1} parent=65 // pred_region
          _
        $region74: #{up_interpolate_sample.1} parent=65 // pred_fallthru
          _
      $region66: #{up_interpolate_sample.1} parent=5 // pred_fallthru
        _
      %p328 = scmp.le.s32.totalorder 2, %s9
      // Predicated region
      $region75: #{up_interpolate_sample.1} parent=5 // pred_check
        %p329 = pneg %p328
      $region76: #{up_interpolate_sample.1} parent=5 // pred_check_branch
        %331 = sbr.rel (%p329) target = $region78
      $region77: #{up_interpolate_sample.1} parent=5 // pred_region
        %s332 = ssub.s32 %s9, 2
        // Predicated region
        $region79: #{up_interpolate_sample.1} parent=77 // pred_check
          %p333 = pneg %p122
        $region80: #{up_interpolate_sample.1} parent=77 // pred_check_branch
          %335 = sbr.rel (%p333) target = $region82
        $region81: #{up_interpolate_sample.1} parent=77 // pred_region
          %p336 = scmp.lt.s32.totalorder %s20, 1
          %s337 = scalar_select %p336, %s20, 1
          %p338 = scmp.lt.s32.totalorder %s21, 1
          %s339 = scalar_select %p338, %s21, 1
          %s340 = smul.addr %s337, 2
          %s341 = sadd.s32 %s339, %s340
          %s342 = smul.addr %s341, 8
          %s343 = scalar_lea.vmem %s3, %s342
        $region82: #{up_interpolate_sample.1} parent=77 // pred_fallthru
          _
      $region78: #{up_interpolate_sample.1} parent=5 // pred_fallthru
        _
    $region6: #{up_interpolate_sample.1} parent=1 // loop_footer
      %s13 = sadd.s32 1, %s9
    $region7: #{up_interpolate_sample.1} parent=1 // loop_footer_branch
      %8 = sbr.rel target = $region3
    $region8: #{up_interpolate_sample.1} parent=1 // loop_exit
      _

</llo_original>
